<compile_context>
chip_gen: v5e
topology: v5e:2x2
jax: 0.10.0
libtpu: 0.0.40
codegen_flags: <defaults>
</compile_context>

<pallas_src>
import jax
import jax.numpy as jnp
import numpy as np
from jax.experimental import pallas as pl
from jax.experimental.pallas import tpu as pltpu

EPS = 1e-5      # InstanceNorm3d default eps
LEAK = 0.01     # leaky_relu negative_slope


def instnorm_lrelu_kernel(x_ref, g_ref, b_ref, o_ref):
    # x_ref: (TR, S) rows = (n, c) instances; g_ref/b_ref: (TR, 1) per-row affine.
    x = x_ref[...]
    mean = jnp.mean(x, axis=-1, keepdims=True)
    var = jnp.mean((x - mean) ** 2, axis=-1, keepdims=True)   # biased variance (PyTorch)
    scale = g_ref[...] * jax.lax.rsqrt(var + EPS)
    shift = b_ref[...] - mean * scale
    y = x * scale + shift
    o_ref[...] = jnp.where(y >= 0.0, y, LEAK * y)


def conv_matmul_kernel(a_ref, w_ref, bias_ref, o_ref):
    # a: (TR, Kp) im2col rows, w: (Kp, Np), bias: (1, Np), o: (TR, Np).
    # Single well-shaped MXU pass per row tile; output is lane-dense (Np = 128k).
    o_ref[...] = (jnp.dot(a_ref[...], w_ref[...],
                          preferred_element_type=jnp.float32)
                  + bias_ref[...]).astype(o_ref.dtype)


def _round_up(x, m):
    return ((x + m - 1) // m) * m


def downsampling_module(x, gamma, beta, conv_w, conv_b):
    """x: (N, C, D, H, W) f32. Returns (activation, downsampled)."""
    N, C, D, H, W = x.shape
    Cout = conv_w.shape[0]
    S = D * H * W
    NC = N * C

    # ---- instance norm + leaky relu (Pallas kernel 1, row-tiled) ----
    x2 = x.reshape(NC, S)
    g_rows = jnp.tile(gamma, (N,)).reshape(NC, 1)
    b_rows = jnp.tile(beta, (N,)).reshape(NC, 1)

    TRN = 8 if NC >= 8 else NC   # rows per block (multiple of 8, or full extent)
    act2 = pl.pallas_call(
        instnorm_lrelu_kernel,
        out_shape=jax.ShapeDtypeStruct((NC, S), jnp.float32),
        grid=(pl.cdiv(NC, TRN),),
        in_specs=[
            pl.BlockSpec((TRN, S), lambda i: (i, 0)),
            pl.BlockSpec((TRN, 1), lambda i: (i, 0)),
            pl.BlockSpec((TRN, 1), lambda i: (i, 0)),
        ],
        out_specs=pl.BlockSpec((TRN, S), lambda i: (i, 0)),
        compiler_params=pltpu.CompilerParams(dimension_semantics=("parallel",)),
    )(x2, g_rows, b_rows)
    act = act2.reshape(N, C, D, H, W)

    # ---- Conv3d k=3 s=2 p=1 (Pallas kernel 2: single folded matmul) ----
    Do, Ho, Wo = (D + 1) // 2, (H + 1) // 2, (W + 1) // 2
    R = N * Do * Ho * Wo
    K = 27 * C
    Kp = _round_up(K, 128)        # lane-dense contraction dim
    Np = _round_up(Cout, 128)     # lane-dense output dim (sliced after the kernel)

    # im2col glue: (R, 27*Cin) operand with K ordered as (kd, kh, kw, cin)
    # to match the (OIDHW -> (kd,kh,kw,cin), Cout) weight reshape below.
    xp = jnp.pad(act, ((0, 0), (0, 0), (1, 1), (1, 1), (1, 1)))
    slabs = []
    for kd in range(3):
        for kh in range(3):
            for kw in range(3):
                sl = xp[:, :, kd:kd + 2 * Do:2, kh:kh + 2 * Ho:2, kw:kw + 2 * Wo:2]
                slabs.append(jnp.transpose(sl, (0, 2, 3, 4, 1)))   # (N,Do,Ho,Wo,C)
    a = jnp.concatenate(slabs, axis=-1).reshape(R, K)              # (R, 27*C)
    a = jnp.pad(a, ((0, 0), (0, Kp - K)))

    w2 = jnp.transpose(conv_w, (2, 3, 4, 1, 0)).reshape(K, Cout)   # (27*C, Cout)
    w2 = jnp.pad(w2, ((0, Kp - K), (0, Np - Cout)))
    bias2 = jnp.pad(conv_b.reshape(1, Cout), ((0, 0), (0, Np - Cout)))

    TR = 128 if R >= 128 else R   # output-row tile (multiple of 8, or full extent)
    out_pad = pl.pallas_call(
        conv_matmul_kernel,
        out_shape=jax.ShapeDtypeStruct((R, Np), jnp.float32),
        grid=(pl.cdiv(R, TR),),
        in_specs=[
            pl.BlockSpec((TR, Kp), lambda i: (i, 0)),
            pl.BlockSpec((Kp, Np), lambda i: (0, 0)),
            pl.BlockSpec((1, Np), lambda i: (0, 0)),
        ],
        out_specs=pl.BlockSpec((TR, Np), lambda i: (i, 0)),
        compiler_params=pltpu.CompilerParams(dimension_semantics=("parallel",)),
    )(a, w2, bias2)

    b_out = jnp.transpose(out_pad[:, :Cout].reshape(N, Do, Ho, Wo, Cout),
                          (0, 4, 1, 2, 3))
    return act, b_out


def reference(x, gamma, beta, conv_w, conv_b):
    mean = jnp.mean(x, axis=(2, 3, 4), keepdims=True)
    var = jnp.mean((x - mean) ** 2, axis=(2, 3, 4), keepdims=True)
    y = (x - mean) * jax.lax.rsqrt(var + EPS)
    y = y * gamma.reshape(1, -1, 1, 1, 1) + beta.reshape(1, -1, 1, 1, 1)
    act = jnp.where(y >= 0.0, y, LEAK * y)
    b = jax.lax.conv_general_dilated(
        act, conv_w, window_strides=(2, 2, 2),
        padding=((1, 1), (1, 1), (1, 1)),
        dimension_numbers=("NCDHW", "OIDHW", "NCDHW"))
    return act, b + conv_b.reshape(1, -1, 1, 1, 1)


if __name__ == "__main__":
    N, Cin, Cout = 2, 4, 8
    D = H = W = 8

    key = jax.random.PRNGKey(0)
    kx, kw, kb, kg, kbe = jax.random.split(key, 5)
    x = jax.random.normal(kx, (N, Cin, D, H, W), dtype=jnp.float32)

    # affine params (PyTorch init is gamma=1, beta=0; perturb slightly so the
    # affine path is actually exercised by the check)
    gamma = 1.0 + 0.1 * jax.random.normal(kg, (Cin,), dtype=jnp.float32)
    beta = 0.05 * jax.random.normal(kbe, (Cin,), dtype=jnp.float32)
    conv_w = 0.1 * jax.random.normal(kw, (Cout, Cin, 3, 3, 3), dtype=jnp.float32)
    conv_b = 0.05 * jax.random.normal(kb, (Cout,), dtype=jnp.float32)

    act, b = jax.jit(downsampling_module)(x, gamma, beta, conv_w, conv_b)
    jax.block_until_ready((act, b))

    act_ref, b_ref = reference(x, gamma, beta, conv_w, conv_b)
    assert act.shape == (N, Cin, D, H, W) and b.shape == (N, Cout, D // 2, H // 2, W // 2)
    np.testing.assert_allclose(np.asarray(act), np.asarray(act_ref), rtol=1e-4, atol=1e-4)
    np.testing.assert_allclose(np.asarray(b), np.asarray(b_ref), rtol=1e-4, atol=1e-4)

    print("KERNEL_OK")
</pallas_src>

<mosaic_0001>
module attributes {stable_mosaic.version = 11 : i64} {
  func.func @instnorm_lrelu_kernel(%arg0: i32, %arg1: memref<8x512xf32, #tpu.memory_space<vmem>>, %arg2: memref<8x1xf32, #tpu.memory_space<vmem>>, %arg3: memref<8x1xf32, #tpu.memory_space<vmem>>, %arg4: memref<8x512xf32, #tpu.memory_space<vmem>>) attributes {dimension_semantics = [#tpu.dimension_semantics<parallel>], iteration_bounds = array<i64: 1>, scalar_prefetch = 0 : i64, scratch_operands = 0 : i64, tpu.core_type = #tpu.core_type<tc>, window_params = [{transform_indices = @transform_0, window_bounds = array<i64: 8, 512>}, {transform_indices = @transform_1, window_bounds = array<i64: 8, 1>}, {transform_indices = @transform_2, window_bounds = array<i64: 8, 1>}, {transform_indices = @transform_3, window_bounds = array<i64: 8, 512>}]} {
    %c0 = arith.constant 0 : index
    %c0_0 = arith.constant 0 : index
    %0 = vector.load %arg1[%c0, %c0_0] : memref<8x512xf32, #tpu.memory_space<vmem>>, vector<8x512xf32>
    %cst = arith.constant dense<0.000000e+00> : vector<8xf32>
    %1 = vector.multi_reduction <add>, %0, %cst [1] : vector<8x512xf32> to vector<8xf32>
    %2 = vector.shape_cast %1 : vector<8xf32> to vector<8x1xf32>
    %cst_1 = arith.constant 5.120000e+02 : f32
    %3 = vector.broadcast %cst_1 : f32 to vector<8x1xf32>
    %4 = arith.divf %2, %3 : vector<8x1xf32>
    %5 = vector.broadcast %4 : vector<8x1xf32> to vector<8x512xf32>
    %6 = arith.subf %0, %5 : vector<8x512xf32>
    %7 = arith.mulf %6, %6 : vector<8x512xf32>
    %cst_2 = arith.constant dense<0.000000e+00> : vector<8xf32>
    %8 = vector.multi_reduction <add>, %7, %cst_2 [1] : vector<8x512xf32> to vector<8xf32>
    %9 = vector.shape_cast %8 : vector<8xf32> to vector<8x1xf32>
    %cst_3 = arith.constant 5.120000e+02 : f32
    %10 = vector.broadcast %cst_3 : f32 to vector<8x1xf32>
    %11 = arith.divf %9, %10 : vector<8x1xf32>
    %c0_4 = arith.constant 0 : index
    %c0_5 = arith.constant 0 : index
    %12 = vector.load %arg2[%c0_4, %c0_5] : memref<8x1xf32, #tpu.memory_space<vmem>>, vector<8x1xf32>
    %cst_6 = arith.constant 9.99999974E-6 : f32
    %13 = vector.broadcast %cst_6 : f32 to vector<8x1xf32>
    %14 = arith.addf %11, %13 : vector<8x1xf32>
    %15 = math.rsqrt %14 : vector<8x1xf32>
    %16 = arith.mulf %12, %15 : vector<8x1xf32>
    %c0_7 = arith.constant 0 : index
    %c0_8 = arith.constant 0 : index
    %17 = vector.load %arg3[%c0_7, %c0_8] : memref<8x1xf32, #tpu.memory_space<vmem>>, vector<8x1xf32>
    %18 = arith.mulf %4, %16 : vector<8x1xf32>
    %19 = arith.subf %17, %18 : vector<8x1xf32>
    %20 = vector.broadcast %16 : vector<8x1xf32> to vector<8x512xf32>
    %21 = arith.mulf %0, %20 : vector<8x512xf32>
    %22 = vector.broadcast %19 : vector<8x1xf32> to vector<8x512xf32>
    %23 = arith.addf %21, %22 : vector<8x512xf32>
    %cst_9 = arith.constant 0.000000e+00 : f32
    %24 = vector.broadcast %cst_9 : f32 to vector<8x512xf32>
    %25 = arith.cmpf oge, %23, %24 : vector<8x512xf32>
    %cst_10 = arith.constant 0.00999999977 : f32
    %26 = vector.broadcast %cst_10 : f32 to vector<8x512xf32>
    %27 = arith.mulf %26, %23 : vector<8x512xf32>
    %28 = arith.select %25, %23, %27 : vector<8x512xi1>, vector<8x512xf32>
    %c0_11 = arith.constant 0 : index
    %c0_12 = arith.constant 0 : index
    %29 = vector.load %arg4[%c0_11, %c0_12] : memref<8x512xf32, #tpu.memory_space<vmem>>, vector<8x512xf32>
    tpu.vector_store %arg4[%c0_11, %c0_12], %28 {strides = array<i32>} : memref<8x512xf32, #tpu.memory_space<vmem>>, vector<8x512xf32>,
    return
  }
  func.func @transform_0(%arg0: i32) -> (i32, i32) {
    %c0_i32 = arith.constant 0 : i32
    %c0_i32_0 = arith.constant 0 : i32
    return %arg0, %c0_i32 : i32, i32
  }
  func.func @transform_1(%arg0: i32) -> (i32, i32) {
    %c0_i32 = arith.constant 0 : i32
    %c0_i32_0 = arith.constant 0 : i32
    return %arg0, %c0_i32 : i32, i32
  }
  func.func @transform_2(%arg0: i32) -> (i32, i32) {
    %c0_i32 = arith.constant 0 : i32
    %c0_i32_0 = arith.constant 0 : i32
    return %arg0, %c0_i32 : i32, i32
  }
  func.func @transform_3(%arg0: i32) -> (i32, i32) {
    %c0_i32 = arith.constant 0 : i32
    %c0_i32_0 = arith.constant 0 : i32
    return %arg0, %c0_i32 : i32, i32
  }
}

module attributes {stable_mosaic.version = 11 : i64} {
  func.func @conv_matmul_kernel(%arg0: i32, %arg1: memref<128x128xf32, #tpu.memory_space<vmem>>, %arg2: memref<128x128xf32, #tpu.memory_space<vmem>>, %arg3: memref<1x128xf32, #tpu.memory_space<vmem>>, %arg4: memref<128x128xf32, #tpu.memory_space<vmem>>) attributes {dimension_semantics = [#tpu.dimension_semantics<parallel>], iteration_bounds = array<i64: 1>, scalar_prefetch = 0 : i64, scratch_operands = 0 : i64, tpu.core_type = #tpu.core_type<tc>, window_params = [{transform_indices = @transform_0, window_bounds = array<i64: 128, 128>}, {pipeline_mode = #tpu.pipeline_mode<synchronous>, transform_indices = @transform_1, window_bounds = array<i64: 128, 128>}, {pipeline_mode = #tpu.pipeline_mode<synchronous>, transform_indices = @transform_2, window_bounds = array<i64: 1, 128>}, {transform_indices = @transform_3, window_bounds = array<i64: 128, 128>}]} {
    %c0 = arith.constant 0 : index
    %c0_0 = arith.constant 0 : index
    %0 = vector.load %arg1[%c0, %c0_0] : memref<128x128xf32, #tpu.memory_space<vmem>>, vector<128x128xf32>
    %c0_1 = arith.constant 0 : index
    %c0_2 = arith.constant 0 : index
    %1 = vector.load %arg2[%c0_1, %c0_2] : memref<128x128xf32, #tpu.memory_space<vmem>>, vector<128x128xf32>
    %cst = arith.constant dense<0.000000e+00> : vector<128x128xf32>
    %2 = tpu.matmul %0, %1, %cst {dimension_numbers = #tpu.dot_dimension_numbers<[1], [0], [0], [1], [0, 0, 1, 1], [], []>} : vector<128x128xf32>, vector<128x128xf32>, vector<128x128xf32> -> vector<128x128xf32>
    %c0_3 = arith.constant 0 : index
    %c0_4 = arith.constant 0 : index
    %3 = vector.load %arg3[%c0_3, %c0_4] : memref<1x128xf32, #tpu.memory_space<vmem>>, vector<1x128xf32>
    %4 = vector.broadcast %3 : vector<1x128xf32> to vector<128x128xf32>
    %5 = arith.addf %2, %4 : vector<128x128xf32>
    %c0_5 = arith.constant 0 : index
    %c0_6 = arith.constant 0 : index
    %6 = vector.load %arg4[%c0_5, %c0_6] : memref<128x128xf32, #tpu.memory_space<vmem>>, vector<128x128xf32>
    tpu.vector_store %arg4[%c0_5, %c0_6], %5 {strides = array<i32>} : memref<128x128xf32, #tpu.memory_space<vmem>>, vector<128x128xf32>,
    return
  }
  func.func @transform_0(%arg0: i32) -> (i32, i32) {
    %c0_i32 = arith.constant 0 : i32
    %c0_i32_0 = arith.constant 0 : i32
    return %arg0, %c0_i32 : i32, i32
  }
  func.func @transform_1(%arg0: i32) -> (i32, i32) {
    %c0_i32 = arith.constant 0 : i32
    %c0_i32_0 = arith.constant 0 : i32
    %c0_i32_1 = arith.constant 0 : i32
    return %c0_i32, %c0_i32_0 : i32, i32
  }
  func.func @transform_2(%arg0: i32) -> (i32, i32) {
    %c0_i32 = arith.constant 0 : i32
    %c0_i32_0 = arith.constant 0 : i32
    %c0_i32_1 = arith.constant 0 : i32
    return %c0_i32, %c0_i32_0 : i32, i32
  }
  func.func @transform_3(%arg0: i32) -> (i32, i32) {
    %c0_i32 = arith.constant 0 : i32
    %c0_i32_0 = arith.constant 0 : i32
    return %arg0, %c0_i32 : i32, i32
  }
}

</mosaic_0001>

<llo_original>
// kernel: tile.0
$region0: #{tile.0}
  %s0 = inlined_call_operand.vmem [shape: f32[2,4], index: 0, kind: input, shape index: {}]
  %s1 = inlined_call_operand.vmem [shape: f32[8,1], index: 1, kind: output, shape index: {}]
  $region1: #{tile.0} parent=0
    #allocation0 [shape = 'u8[4096]{0}', space=vmem, size = 0x1000, scoped, tag = 'scoped mem for input reshape']
    %s3 = ssub.s32 4, 1
    %v4 = vld [vmem:[%s0] sm:%s3]
    %5 = vst [vmem:[#allocation0] sm:%s3] %v4
    %v6 = vld [vmem:[#allocation0] sm:$0x3]
    %vm7 = vcmask 7168
    %8 = vst.msk [vmem:[%s1] ss:$4 sm:$0x3] %vm7, %v6
    %v9 = vld [vmem:[#allocation0] sm:$0x3]
    %10 = vrot.lane.b32.xlu0 %v9, 127
    %v11 = vpop.permute.xlu0 %10
    %vm12 = vcmask 7168
    %s13 = scalar_lea.vmem %s1, 1
    %14 = vst.msk [vmem:[%s13] ss:$4 sm:$0x3] %vm12, %v11
    %v15 = vld [vmem:[#allocation0] sm:$0x3]
    %16 = vrot.lane.b32.xlu0 %v15, 126
    %v17 = vpop.permute.xlu0 %16
    %vm18 = vcmask 7168
    %s19 = scalar_lea.vmem %s1, 2
    %20 = vst.msk [vmem:[%s19] ss:$4 sm:$0x3] %vm18, %v17
    %v21 = vld [vmem:[#allocation0] sm:$0x3]
    %22 = vrot.lane.b32.xlu0 %v21, 125
    %v23 = vpop.permute.xlu0 %22
    %vm24 = vcmask 7168
    %s25 = scalar_lea.vmem %s1, 3
    %26 = vst.msk [vmem:[%s25] ss:$4 sm:$0x3] %vm24, %v23

// kernel: tile.13
$region0: #{tile.13}
  #allocation2 [shape = 's32[1]{0}', space=sflag, size = 0x4, scoped, tag = 'scoped memory for tile.13']
  %s0 = inlined_call_operand.hbm [shape: f32[4], index: 0, kind: input, shape index: {}]
  %s1 = inlined_call_operand.vmem [shape: f32[2,4], index: 1, kind: output, shape index: {}]
  $region1: #{tile.13} parent=0
    #allocation0 [shape = 'u8[512]{0}', space=vmem, size = 0x400, scoped, tag = 'operand span for operand 0']
    #allocation1 [shape = 's32[1]{0}', space=sflag, size = 0x4, scoped, tag = 'scoped memory for tile.13']
    %2 = vsyncpa [#allocation1], 0
    // Predicated region
    $region2: #{tile.13} parent=1 // pred_check
      _
    $region3: #{tile.13} parent=1 // pred_check_branch
      %4 = sbr.rel (0) target = $region5
    $region4: #{tile.13} parent=1 // pred_region
      %6 = vsyncadd [#allocation1], 0
      %s8 = sshll.u32 %s0, 4
      %s9 = int_to_ptr.hbm [resolvable:$true] %s8
      %s10 = sshll.u32 [#allocation0], 4
      %s11 = int_to_ptr.vmem [resolvable:$true] %s10
      %13 = dma.hbm_to_vmem [thread:$0]  %s9, 16, %s11, [#allocation1]
    $region5: #{tile.13} parent=1 // pred_fallthru
      _
    // Predicated region
    $region6: #{tile.13} parent=1 // pred_check
      _
    $region7: #{tile.13} parent=1 // pred_check_branch
      %15 = sbr.rel (0) target = $region9
    $region8: #{tile.13} parent=1 // pred_region
      %17 = dma.done [#allocation1], 16
    $region9: #{tile.13} parent=1 // pred_fallthru
      _
    %v18 = vld [vmem:[#allocation0] ss:$0 sm:$0xff]
    %19 = vst [vmem:[%s1] sm:$0x3] %v18
    %20 = vsyncpa [#allocation1], 1

// kernel: downsampling_module.2
$region0: #{downsampling_module.2}
  #allocation0 [shape = 'u32[]', space=smem, size = 0x4, offset = 0x4, fixed_abs, tag = 'smem constant byte address 0x4 - core index']
  #allocation1 [shape = 'u32[72,128]{1,0:T(1,128)}', space=vmem, size = 0x9000, scoped, tag = 'internal scratch']
  %s0 = inlined_call_operand.vmem [shape: f32[8,512], index: 0, kind: input, shape index: {}]
  %s1 = inlined_call_operand.vmem [shape: f32[8,1], index: 1, kind: input, shape index: {}]
  %s2 = inlined_call_operand.vmem [shape: f32[8,1], index: 2, kind: input, shape index: {}]
  %s3 = inlined_call_operand.vmem [shape: f32[8,512], index: 3, kind: output, shape index: {}]
  %s4 = sld [smem:[#allocation0]]
  $region22: #{downsampling_module.2} parent=0
    _
  %s6 = ssub.s32 1, %s4
  %s7 = scalar_select 0, %s6, %s4
  // Predicated region
  $region2: #{downsampling_module.2} parent=0 // pred_check
    _
  $region3: #{downsampling_module.2} parent=0 // pred_check_branch
    %9 = sbr.rel (0) target = $region5
  $region4: #{downsampling_module.2} parent=0 // pred_region
    _
  $region5: #{downsampling_module.2} parent=0 // pred_fallthru
    _
  // Predicated region
  $region6: #{downsampling_module.2} parent=0 // pred_check
    _
  $region7: #{downsampling_module.2} parent=0 // pred_check_branch
    %11 = sbr.rel (0) target = $region9
  $region8: #{downsampling_module.2} parent=0 // pred_region
    _
  $region9: #{downsampling_module.2} parent=0 // pred_fallthru
    _
  // Predicated region
  $region10: #{downsampling_module.2} parent=0 // pred_check
    _
  $region11: #{downsampling_module.2} parent=0 // pred_check_branch
    %13 = sbr.rel (0) target = $region13
  $region12: #{downsampling_module.2} parent=0 // pred_region
    _
  $region13: #{downsampling_module.2} parent=0 // pred_fallthru
    _
  %v14 = vld [vmem:[%s0] sm:$0xff]
  %v15 = vld [vmem:[%s0 + $0x8] sm:$0xff]
  %v16 = vld [vmem:[%s0 + $0x10] sm:$0xff]
  %v17 = vld [vmem:[%s0 + $0x18] sm:$0xff]
  %v18 = vadd.f32 %v14, %v15
  %v19 = vadd.f32 %v18, %v16
  %v20 = vadd.f32 %v19, %v17
  %21 = vadd.xlane.f32.xlu0 %v20
  %v22 = vpop.xlane.xlu0 %21
  %v23 = vrcp.pop 512.0
  %v24 = vmul.f32 512.0, %v23
  %v25 = vsub.f32 1.0, %v24
  %v26 = vmul.f32 %v23, %v25
  %v27 = vadd.f32 %v23, %v26
  %vm28 = vweird.f32 %v23
  %v29 = vsel %vm28, %v23, %v27
  %v30 = vmul.f32 %v22, %v29
  %v31 = vsub.f32 %v14, %v30
  %v32 = vsub.f32 %v15, %v30
  %v33 = vsub.f32 %v16, %v30
  %v34 = vsub.f32 %v17, %v30
  %v35 = vmul.f32 %v31, %v31
  %v36 = vmul.f32 %v32, %v32
  %v37 = vmul.f32 %v33, %v33
  %v38 = vmul.f32 %v34, %v34
  %v39 = vadd.f32 %v35, %v36
  %v40 = vadd.f32 %v39, %v37
  %v41 = vadd.f32 %v40, %v38
  %42 = vadd.xlane.f32.xlu0 %v41
  %v43 = vpop.xlane.xlu0 %42
  %v44 = vmul.f32 %v43, %v29
  %v45 = vld [vmem:[%s1] sm:$0xff]
  %v46 = vadd.f32 %v44, 1e-05
  %v47 = vrsqrt.pop %v46
  %v48 = vmul.f32 %v47, %v46
  %v49 = vmul.f32 %v48, %v47
  %v50 = vmul.f32 0.5, %v49
  %v51 = vsub.f32 1.5, %v50
  %v52 = vmul.f32 %v47, %v51
  %vm53 = vweird.f32 %v46
  %vm54 = vweird.f32 %v47
  %vm55 = vmor %vm53, %vm54
  %v56 = vsel %vm55, %v47, %v52
  %v57 = vmul.f32 %v45, %v56
  %v58 = vld [vmem:[%s2] sm:$0xff]
  %v59 = vmul.f32 %v30, %v57
  %v60 = vsub.f32 %v58, %v59
  %62 = vset.pattern.permute.xlu0 0
  %63 = vperm.xlu0 %62, %v57
  %v64 = vpop.permute.xlu0 %63
  %v66 = vmul.f32 %v14, %v64
  %v67 = vmul.f32 %v15, %v64
  %v68 = vmul.f32 %v16, %v64
  %v69 = vmul.f32 %v17, %v64
  %71 = vset.pattern.permute.xlu0 0
  %72 = vperm.xlu0 %71, %v60
  %v73 = vpop.permute.xlu0 %72
  %v75 = vadd.f32 %v66, %v73
  %v76 = vadd.f32 %v67, %v73
  %v77 = vadd.f32 %v68, %v73
  %v78 = vadd.f32 %v69, %v73
  %vm79 = vcmp.ge.f32.partialorder %v75, 0.0
  %vm80 = vcmp.ge.f32.partialorder %v76, 0.0
  %vm81 = vcmp.ge.f32.partialorder %v77, 0.0
  %vm82 = vcmp.ge.f32.partialorder %v78, 0.0
  %v83 = vmul.f32 %v75, 0.01
  %v84 = vmul.f32 %v76, 0.01
  %v85 = vmul.f32 %v77, 0.01
  %v86 = vmul.f32 %v78, 0.01
  %v87 = vsel %vm79, %v75, %v83
  %v88 = vsel %vm80, %v76, %v84
  %v89 = vsel %vm81, %v77, %v85
  %v90 = vsel %vm82, %v78, %v86
  %91 = vst [vmem:[%s3] sm:$0xff] %v87
  %92 = vst [vmem:[%s3 + $0x8] sm:$0xff] %v88
  %93 = vst [vmem:[%s3 + $0x10] sm:$0xff] %v89
  %94 = vst [vmem:[%s3 + $0x18] sm:$0xff] %v90
  // Predicated region
  $region14: #{downsampling_module.2} parent=0 // pred_check
    _
  $region15: #{downsampling_module.2} parent=0 // pred_check_branch
    %96 = sbr.rel (0) target = $region17
  $region16: #{downsampling_module.2} parent=0 // pred_region
    _
  $region17: #{downsampling_module.2} parent=0 // pred_fallthru
    _
  // Predicated region
  $region18: #{downsampling_module.2} parent=0 // pred_check
    _
  $region19: #{downsampling_module.2} parent=0 // pred_check_branch
    %98 = sbr.rel (0) target = $region21
  $region20: #{downsampling_module.2} parent=0 // pred_region
    _
  $region21: #{downsampling_module.2} parent=0 // pred_fallthru
    _

// kernel: downsampling_module.3
$region0: #{downsampling_module.3}
  #allocation0 [shape = 'u32[]', space=smem, size = 0x4, offset = 0x4, fixed_abs, tag = 'smem constant byte address 0x4 - core index']
  #allocation1 [shape = 'u32[72,128]{1,0:T(1,128)}', space=vmem, size = 0x9000, scoped, tag = 'internal scratch']
  %s0 = inlined_call_operand.vmem [shape: f32[128,128], index: 0, kind: input, shape index: {}]
  %s1 = inlined_call_operand.vmem [shape: f32[128,128], index: 1, kind: input, shape index: {}]
  %s2 = inlined_call_operand.vmem [shape: f32[1,128], index: 2, kind: input, shape index: {}]
  %s3 = inlined_call_operand.hbm [shape: f32[128,128], index: 3, kind: output, shape index: {}]
  %s4 = sld [smem:[#allocation0]]
  $region22: #{downsampling_module.3} parent=0
    _
  %s6 = ssub.s32 1, %s4
  %s7 = scalar_select 0, %s6, %s4
  $region1: #{downsampling_module.3} parent=0
    #allocation2 [shape = 'u8[65536]{0}', space=vmem, size = 0x10000, scoped, tag = 'output window, operand 0, single buffered']
    #allocation3 [shape = 's32[1]{0}', space=sflag, size = 0x4, scoped, tag = 'scoped memory for downsampling_module.3']
    %8 = vsyncpa [#allocation3], 0
    // Predicated region
    $region2: #{downsampling_module.3} parent=1 // pred_check
      _
    $region3: #{downsampling_module.3} parent=1 // pred_check_branch
      %10 = sbr.rel (0) target = $region5
    $region4: #{downsampling_module.3} parent=1 // pred_region
      _
    $region5: #{downsampling_module.3} parent=1 // pred_fallthru
      _
    // Predicated region
    $region6: #{downsampling_module.3} parent=1 // pred_check
      _
    $region7: #{downsampling_module.3} parent=1 // pred_check_branch
      %12 = sbr.rel (0) target = $region9
    $region8: #{downsampling_module.3} parent=1 // pred_region
      _
    $region9: #{downsampling_module.3} parent=1 // pred_fallthru
      _
    // Predicated region
    $region10: #{downsampling_module.3} parent=1 // pred_check
      _
    $region11: #{downsampling_module.3} parent=1 // pred_check_branch
      %14 = sbr.rel (0) target = $region13
    $region12: #{downsampling_module.3} parent=1 // pred_region
      _
    $region13: #{downsampling_module.3} parent=1 // pred_fallthru
      _
    %v15 = vld [vmem:[%s0] sm:$0xff]
    %v16 = vld [vmem:[%s0 + $0x8] sm:$0xff]
    %v17 = vld [vmem:[%s0 + $0x10] sm:$0xff]
    %v18 = vld [vmem:[%s0 + $0x18] sm:$0xff]
    %v19 = vld [vmem:[%s0 + $0x20] sm:$0xff]
    %v20 = vld [vmem:[%s0 + $0x28] sm:$0xff]
    %v21 = vld [vmem:[%s0 + $0x30] sm:$0xff]
    %v22 = vld [vmem:[%s0 + $0x38] sm:$0xff]
    %v23 = vld [vmem:[%s0 + $0x40] sm:$0xff]
    %v24 = vld [vmem:[%s0 + $0x48] sm:$0xff]
    %v25 = vld [vmem:[%s0 + $0x50] sm:$0xff]
    %v26 = vld [vmem:[%s0 + $0x58] sm:$0xff]
    %v27 = vld [vmem:[%s0 + $0x60] sm:$0xff]
    %v28 = vld [vmem:[%s0 + $0x68] sm:$0xff]
    %v29 = vld [vmem:[%s0 + $0x70] sm:$0xff]
    %v30 = vld [vmem:[%s0 + $0x78] sm:$0xff]
    %v31 = vld [vmem:[%s1] sm:$0xff]
    %v32 = vld [vmem:[%s1 + $0x8] sm:$0xff]
    %v33 = vld [vmem:[%s1 + $0x10] sm:$0xff]
    %v34 = vld [vmem:[%s1 + $0x18] sm:$0xff]
    %v35 = vld [vmem:[%s1 + $0x20] sm:$0xff]
    %v36 = vld [vmem:[%s1 + $0x28] sm:$0xff]
    %v37 = vld [vmem:[%s1 + $0x30] sm:$0xff]
    %v38 = vld [vmem:[%s1 + $0x38] sm:$0xff]
    %v39 = vld [vmem:[%s1 + $0x40] sm:$0xff]
    %v40 = vld [vmem:[%s1 + $0x48] sm:$0xff]
    %v41 = vld [vmem:[%s1 + $0x50] sm:$0xff]
    %v42 = vld [vmem:[%s1 + $0x58] sm:$0xff]
    %v43 = vld [vmem:[%s1 + $0x60] sm:$0xff]
    %v44 = vld [vmem:[%s1 + $0x68] sm:$0xff]
    %v45 = vld [vmem:[%s1 + $0x70] sm:$0xff]
    %v46 = vld [vmem:[%s1 + $0x78] sm:$0xff]
    %v47 = vld [vmem:[%s2] sm:$0x1]
    %v49 = vperm.slane %v47, 0
    %51 = vmatpush.msra.mxu0 %v46
    %52 = vmatpush.msra.mxu0 %v45
    %53 = vmatpush.msra.mxu0 %v44
    %54 = vmatpush.msra.mxu0 %v43
    %55 = vmatpush.msra.mxu0 %v42
    %56 = vmatpush.msra.mxu0 %v41
    %57 = vmatpush.msra.mxu0 %v40
    %58 = vmatpush.msra.mxu0 %v39
    %59 = vmatpush.msra.mxu0 %v38
    %60 = vmatpush.msra.mxu0 %v37
    %61 = vmatpush.msra.mxu0 %v36
    %62 = vmatpush.msra.mxu0 %v35
    %63 = vmatpush.msra.mxu0 %v34
    %64 = vmatpush.msra.mxu0 %v33
    %65 = vmatpush.msra.mxu0 %v32
    %66 = vmatpush.msra.mxu0 %v31
    %67 = vmatmul.f32.gmra.mxu0 %v15
    %v68 = vpop.f32.mrf.mxu0
    %v69 = vadd.f32 %v49, %v68
    %70 = vmatmul.f32.gmra.mxu0 %v16
    %v71 = vpop.f32.mrf.mxu0
    %v72 = vadd.f32 %v49, %v71
    %73 = vmatmul.f32.gmra.mxu0 %v17
    %v74 = vpop.f32.mrf.mxu0
    %v75 = vadd.f32 %v49, %v74
    %76 = vmatmul.f32.gmra.mxu0 %v18
    %v77 = vpop.f32.mrf.mxu0
    %v78 = vadd.f32 %v49, %v77
    %79 = vmatmul.f32.gmra.mxu0 %v19
    %v80 = vpop.f32.mrf.mxu0
    %v81 = vadd.f32 %v49, %v80
    %82 = vmatmul.f32.gmra.mxu0 %v20
    %v83 = vpop.f32.mrf.mxu0
    %v84 = vadd.f32 %v49, %v83
    %85 = vmatmul.f32.gmra.mxu0 %v21
    %v86 = vpop.f32.mrf.mxu0
    %v87 = vadd.f32 %v49, %v86
    %88 = vmatmul.f32.gmra.mxu0 %v22
    %v89 = vpop.f32.mrf.mxu0
    %v90 = vadd.f32 %v49, %v89
    %91 = vmatmul.f32.gmra.mxu0 %v23
    %v92 = vpop.f32.mrf.mxu0
    %v93 = vadd.f32 %v49, %v92
    %94 = vmatmul.f32.gmra.mxu0 %v24
    %v95 = vpop.f32.mrf.mxu0
    %v96 = vadd.f32 %v49, %v95
    %97 = vmatmul.f32.gmra.mxu0 %v25
    %v98 = vpop.f32.mrf.mxu0
    %v99 = vadd.f32 %v49, %v98
    %100 = vmatmul.f32.gmra.mxu0 %v26
    %v101 = vpop.f32.mrf.mxu0
    %v102 = vadd.f32 %v49, %v101
    %103 = vmatmul.f32.gmra.mxu0 %v27
    %v104 = vpop.f32.mrf.mxu0
    %v105 = vadd.f32 %v49, %v104
    %106 = vmatmul.f32.gmra.mxu0 %v28
    %v107 = vpop.f32.mrf.mxu0
    %v108 = vadd.f32 %v49, %v107
    %109 = vmatmul.f32.gmra.mxu0 %v29
    %v110 = vpop.f32.mrf.mxu0
    %v111 = vadd.f32 %v49, %v110
    %112 = vmatmul.f32.gmra.mxu0 %v30
    %v113 = vpop.f32.mrf.mxu0
    %v114 = vadd.f32 %v49, %v113
    %115 = vdwg.mxu0
    %116 = vst [vmem:[#allocation2] sm:$0xff] %v69
    %117 = vst [vmem:[#allocation2 + $0x8] sm:$0xff] %v72
    %118 = vst [vmem:[#allocation2 + $0x10] sm:$0xff] %v75
    %119 = vst [vmem:[#allocation2 + $0x18] sm:$0xff] %v78
    %120 = vst [vmem:[#allocation2 + $0x20] sm:$0xff] %v81
    %121 = vst [vmem:[#allocation2 + $0x28] sm:$0xff] %v84
    %122 = vst [vmem:[#allocation2 + $0x30] sm:$0xff] %v87
    %123 = vst [vmem:[#allocation2 + $0x38] sm:$0xff] %v90
    %124 = vst [vmem:[#allocation2 + $0x40] sm:$0xff] %v93
    %125 = vst [vmem:[#allocation2 + $0x48] sm:$0xff] %v96
    %126 = vst [vmem:[#allocation2 + $0x50] sm:$0xff] %v99
    %127 = vst [vmem:[#allocation2 + $0x58] sm:$0xff] %v102
    %128 = vst [vmem:[#allocation2 + $0x60] sm:$0xff] %v105
    %129 = vst [vmem:[#allocation2 + $0x68] sm:$0xff] %v108
    %130 = vst [vmem:[#allocation2 + $0x70] sm:$0xff] %v111
    %131 = vst [vmem:[#allocation2 + $0x78] sm:$0xff] %v114
    // Predicated region
    $region14: #{downsampling_module.3} parent=1 // pred_check
      _
    $region15: #{downsampling_module.3} parent=1 // pred_check_branch
      %133 = sbr.rel (0) target = $region17
    $region16: #{downsampling_module.3} parent=1 // pred_region
      %135 = vsyncadd [#allocation3], 0
      %s136 = sshll.u32 [#allocation2], 4
      %s137 = int_to_ptr.vmem [resolvable:$true] %s136
      %s138 = sshll.u32 %s3, 4
      %s139 = int_to_ptr.hbm [resolvable:$true] %s138
      %144 = dma.vmem_to_hbm [thread:$0]  %s137, 2048, %s139, [#allocation3], 128, 128, 8
    $region17: #{downsampling_module.3} parent=1 // pred_fallthru
      _
    // Predicated region
    $region18: #{downsampling_module.3} parent=1 // pred_check
      _
    $region19: #{downsampling_module.3} parent=1 // pred_check_branch
      %146 = sbr.rel (0) target = $region21
    $region20: #{downsampling_module.3} parent=1 // pred_region
      %148 = dma.done [#allocation3], 2048
    $region21: #{downsampling_module.3} parent=1 // pred_fallthru
      _
    %149 = vsyncpa [#allocation3], 1

</llo_original>
